<compile_context>
chip_gen: v7x
topology: tpu7x:2x2x1
jax: 0.10.0
libtpu: 0.0.40
codegen_flags: <defaults>
</compile_context>

<pallas_src>
import jax
import jax.numpy as jnp
from jax.experimental import pallas as pl
from jax.experimental.pallas import tpu as pltpu


def cwrnn_kernel(x_ref, mask_ref, wt_ref, ut_ref, o_ref, xu_ref):
    """Full ClockworkRNN recurrence over the sequence.

    x_ref:    (T, I)    VMEM  - input sequence
    mask_ref: (T, Hp)   VMEM  - per-timestep clock masks (0/1 floats, lane-padded)
    wt_ref:   (Hp, Hp)  VMEM  - recurrent weights, PRE-TRANSPOSED (W.T, padded)
    ut_ref:   (I, Hp)   VMEM  - input weights, PRE-TRANSPOSED (U.T, padded)
    o_ref:    (1, Hp)   VMEM  - final hidden state (lane-padded)
    xu_ref:   (T, Hp)   VMEM scratch - precomputed input projections
    """
    T = x_ref.shape[0]
    Hp = wt_ref.shape[0]

    # Input projection for all timesteps at once: xu[t] = x[t] @ U.T -> (T, Hp).
    # Contraction is on dim 0 of ut_ref (MXU-native, no transpose in-kernel).
    xu_ref[...] = jnp.dot(x_ref[...], ut_ref[...],
                          preferred_element_type=jnp.float32)

    # Loop-invariant recurrent weight tile, hoisted out of the unrolled loop.
    w_t = wt_ref[...]

    h = jnp.zeros((1, Hp), jnp.float32)
    # T is a static Python int -> the loop is fully unrolled; every slice below
    # is static (no per-step dynamic_slice on live register values).
    for t in range(T):
        mask_t = mask_ref[pl.ds(t, 1), :]                    # (1, Hp) ref read
        # h @ (W * mask).T == (h * mask) @ W.T
        rec = jnp.dot(h * mask_t, w_t,
                      preferred_element_type=jnp.float32)    # (1, Hp) on MXU
        h = jnp.tanh(rec + xu_ref[pl.ds(t, 1), :])           # tanh -> EUP slot
    o_ref[...] = h


def clockwork_masks(clock_val, hidden_size):
    """Precompute the (T, H) 0/1 clock masks in plain JAX (index bookkeeping).

    Assumes clock_val entries are strictly positive (as in the PyTorch module).
    """
    i = jnp.arange(hidden_size, dtype=jnp.int32)[None, :]          # (1, H)
    clk = clock_val.astype(jnp.int32)[:, None]                      # (T, 1)
    mask = jnp.logical_or((i % 2) == 0, (i % clk) == 0)
    return mask.astype(jnp.float32)                                 # (T, H)


def clockwork_rnn_forward(seq_input, clock_val, W, U):
    """Pallas-backed ClockworkRNN forward. Returns the final hidden state (H,)."""
    T, I = seq_input.shape
    H = W.shape[0]
    Hp = ((H + 127) // 128) * 128   # pad hidden dim to full 128-lane width

    masks = clockwork_masks(clock_val, H)                                # (T, H)
    masks_p = jnp.zeros((T, Hp), jnp.float32).at[:, :H].set(masks)       # (T, Hp)
    # Pre-transpose + zero-pad weights once, outside the kernel.
    w_t = jnp.zeros((Hp, Hp), jnp.float32).at[:H, :H].set(
        W.T.astype(jnp.float32))                                         # (Hp, Hp)
    u_t = jnp.zeros((I, Hp), jnp.float32).at[:, :H].set(
        U.T.astype(jnp.float32))                                         # (I, Hp)

    out = pl.pallas_call(
        cwrnn_kernel,
        out_shape=jax.ShapeDtypeStruct((1, Hp), jnp.float32),
        in_specs=[
            pl.BlockSpec(memory_space=pltpu.MemorySpace.VMEM),  # seq_input
            pl.BlockSpec(memory_space=pltpu.MemorySpace.VMEM),  # masks (padded)
            pl.BlockSpec(memory_space=pltpu.MemorySpace.VMEM),  # W.T (padded)
            pl.BlockSpec(memory_space=pltpu.MemorySpace.VMEM),  # U.T (padded)
        ],
        out_specs=pl.BlockSpec(memory_space=pltpu.MemorySpace.VMEM),
        scratch_shapes=[pltpu.VMEM((T, Hp), jnp.float32)],      # xu scratch
    )(seq_input.astype(jnp.float32), masks_p, w_t, u_t)
    return out[0, :H]


def clockwork_rnn_ref(seq_input, clock_val, W, U):
    """Pure-JAX reference mirroring the PyTorch module exactly."""
    T, _ = seq_input.shape
    H = W.shape[0]
    masks = clockwork_masks(clock_val, H)
    h = jnp.zeros((H,), jnp.float32)
    for t in range(T):
        h = jnp.tanh((W * masks[t]) @ h + U @ seq_input[t])
    return h


if __name__ == "__main__":
    key = jax.random.PRNGKey(0)
    k_x, k_w, k_u = jax.random.split(key, 3)

    input_size = 8
    hidden_size = 32
    seq_len = 8

    # Deterministic parameters (randn-style init, matching nn.Parameter(torch.randn(...))).
    W = jax.random.normal(k_w, (hidden_size, hidden_size), dtype=jnp.float32)
    U = jax.random.normal(k_u, (hidden_size, input_size), dtype=jnp.float32)

    # Inputs: x[0] = sequence (T, I), x[1] = per-timestep clock values (positive ints).
    seq_input = jax.random.normal(k_x, (seq_len, input_size), dtype=jnp.float32)
    clock_val = jnp.array([1, 2, 3, 4, 5, 2, 3, 4], dtype=jnp.int32)

    h_kernel = clockwork_rnn_forward(seq_input, clock_val, W, U)
    h_kernel = jax.block_until_ready(h_kernel)

    h_ref = clockwork_rnn_ref(seq_input, clock_val, W, U)
    assert h_kernel.shape == (hidden_size,)
    assert jnp.allclose(h_kernel, h_ref, atol=1e-5, rtol=1e-5), (
        "mismatch vs reference")

    print("KERNEL_OK")
</pallas_src>

<mosaic_0001>
module attributes {stable_mosaic.version = 11 : i64} {
  func.func @cwrnn_kernel(%arg0: memref<8x8xf32, #tpu.memory_space<vmem>>, %arg1: memref<8x128xf32, #tpu.memory_space<vmem>>, %arg2: memref<128x128xf32, #tpu.memory_space<vmem>>, %arg3: memref<8x128xf32, #tpu.memory_space<vmem>>, %arg4: memref<1x128xf32, #tpu.memory_space<vmem>>, %arg5: memref<8x128xf32, #tpu.memory_space<vmem>>) attributes {dimension_semantics = [], scalar_prefetch = 0 : i64, scratch_operands = 1 : i64, tpu.core_type = #tpu.core_type<tc>} {
    %c0 = arith.constant 0 : index
    %c0_0 = arith.constant 0 : index
    %0 = vector.load %arg0[%c0, %c0_0] : memref<8x8xf32, #tpu.memory_space<vmem>>, vector<8x8xf32>
    %c0_1 = arith.constant 0 : index
    %c0_2 = arith.constant 0 : index
    %1 = vector.load %arg3[%c0_1, %c0_2] : memref<8x128xf32, #tpu.memory_space<vmem>>, vector<8x128xf32>
    %cst = arith.constant dense<0.000000e+00> : vector<8x128xf32>
    %2 = tpu.matmul %0, %1, %cst {dimension_numbers = #tpu.dot_dimension_numbers<[1], [0], [0], [1], [0, 0, 1, 1], [], []>} : vector<8x8xf32>, vector<8x128xf32>, vector<8x128xf32> -> vector<8x128xf32>
    %c0_3 = arith.constant 0 : index
    %c0_4 = arith.constant 0 : index
    %3 = vector.load %arg5[%c0_3, %c0_4] : memref<8x128xf32, #tpu.memory_space<vmem>>, vector<8x128xf32>
    tpu.vector_store %arg5[%c0_3, %c0_4], %2 {strides = array<i32>} : memref<8x128xf32, #tpu.memory_space<vmem>>, vector<8x128xf32>,
    %c0_5 = arith.constant 0 : index
    %c0_6 = arith.constant 0 : index
    %4 = vector.load %arg2[%c0_5, %c0_6] : memref<128x128xf32, #tpu.memory_space<vmem>>, vector<128x128xf32>
    %cst_7 = arith.constant 0.000000e+00 : f32
    %5 = vector.broadcast %cst_7 : f32 to vector<1x128xf32>
    %c0_8 = arith.constant 0 : index
    %c0_9 = arith.constant 0 : index
    %6 = vector.load %arg1[%c0_8, %c0_9] : memref<8x128xf32, #tpu.memory_space<vmem>>, vector<1x128xf32>
    %7 = arith.mulf %5, %6 : vector<1x128xf32>
    %cst_10 = arith.constant dense<0.000000e+00> : vector<1x128xf32>
    %8 = tpu.matmul %7, %4, %cst_10 {dimension_numbers = #tpu.dot_dimension_numbers<[1], [0], [0], [1], [0, 0, 1, 1], [], []>} : vector<1x128xf32>, vector<128x128xf32>, vector<1x128xf32> -> vector<1x128xf32>
    %c0_11 = arith.constant 0 : index
    %c0_12 = arith.constant 0 : index
    %9 = vector.load %arg5[%c0_11, %c0_12] : memref<8x128xf32, #tpu.memory_space<vmem>>, vector<1x128xf32>
    %10 = arith.addf %8, %9 : vector<1x128xf32>
    %11 = math.tanh %10 : vector<1x128xf32>
    %c1 = arith.constant 1 : index
    %c0_13 = arith.constant 0 : index
    %12 = vector.load %arg1[%c1, %c0_13] : memref<8x128xf32, #tpu.memory_space<vmem>>, vector<1x128xf32>
    %13 = arith.mulf %11, %12 : vector<1x128xf32>
    %cst_14 = arith.constant dense<0.000000e+00> : vector<1x128xf32>
    %14 = tpu.matmul %13, %4, %cst_14 {dimension_numbers = #tpu.dot_dimension_numbers<[1], [0], [0], [1], [0, 0, 1, 1], [], []>} : vector<1x128xf32>, vector<128x128xf32>, vector<1x128xf32> -> vector<1x128xf32>
    %c1_15 = arith.constant 1 : index
    %c0_16 = arith.constant 0 : index
    %15 = vector.load %arg5[%c1_15, %c0_16] : memref<8x128xf32, #tpu.memory_space<vmem>>, vector<1x128xf32>
    %16 = arith.addf %14, %15 : vector<1x128xf32>
    %17 = math.tanh %16 : vector<1x128xf32>
    %c2 = arith.constant 2 : index
    %c0_17 = arith.constant 0 : index
    %18 = vector.load %arg1[%c2, %c0_17] : memref<8x128xf32, #tpu.memory_space<vmem>>, vector<1x128xf32>
    %19 = arith.mulf %17, %18 : vector<1x128xf32>
    %cst_18 = arith.constant dense<0.000000e+00> : vector<1x128xf32>
    %20 = tpu.matmul %19, %4, %cst_18 {dimension_numbers = #tpu.dot_dimension_numbers<[1], [0], [0], [1], [0, 0, 1, 1], [], []>} : vector<1x128xf32>, vector<128x128xf32>, vector<1x128xf32> -> vector<1x128xf32>
    %c2_19 = arith.constant 2 : index
    %c0_20 = arith.constant 0 : index
    %21 = vector.load %arg5[%c2_19, %c0_20] : memref<8x128xf32, #tpu.memory_space<vmem>>, vector<1x128xf32>
    %22 = arith.addf %20, %21 : vector<1x128xf32>
    %23 = math.tanh %22 : vector<1x128xf32>
    %c3 = arith.constant 3 : index
    %c0_21 = arith.constant 0 : index
    %24 = vector.load %arg1[%c3, %c0_21] : memref<8x128xf32, #tpu.memory_space<vmem>>, vector<1x128xf32>
    %25 = arith.mulf %23, %24 : vector<1x128xf32>
    %cst_22 = arith.constant dense<0.000000e+00> : vector<1x128xf32>
    %26 = tpu.matmul %25, %4, %cst_22 {dimension_numbers = #tpu.dot_dimension_numbers<[1], [0], [0], [1], [0, 0, 1, 1], [], []>} : vector<1x128xf32>, vector<128x128xf32>, vector<1x128xf32> -> vector<1x128xf32>
    %c3_23 = arith.constant 3 : index
    %c0_24 = arith.constant 0 : index
    %27 = vector.load %arg5[%c3_23, %c0_24] : memref<8x128xf32, #tpu.memory_space<vmem>>, vector<1x128xf32>
    %28 = arith.addf %26, %27 : vector<1x128xf32>
    %29 = math.tanh %28 : vector<1x128xf32>
    %c4 = arith.constant 4 : index
    %c0_25 = arith.constant 0 : index
    %30 = vector.load %arg1[%c4, %c0_25] : memref<8x128xf32, #tpu.memory_space<vmem>>, vector<1x128xf32>
    %31 = arith.mulf %29, %30 : vector<1x128xf32>
    %cst_26 = arith.constant dense<0.000000e+00> : vector<1x128xf32>
    %32 = tpu.matmul %31, %4, %cst_26 {dimension_numbers = #tpu.dot_dimension_numbers<[1], [0], [0], [1], [0, 0, 1, 1], [], []>} : vector<1x128xf32>, vector<128x128xf32>, vector<1x128xf32> -> vector<1x128xf32>
    %c4_27 = arith.constant 4 : index
    %c0_28 = arith.constant 0 : index
    %33 = vector.load %arg5[%c4_27, %c0_28] : memref<8x128xf32, #tpu.memory_space<vmem>>, vector<1x128xf32>
    %34 = arith.addf %32, %33 : vector<1x128xf32>
    %35 = math.tanh %34 : vector<1x128xf32>
    %c5 = arith.constant 5 : index
    %c0_29 = arith.constant 0 : index
    %36 = vector.load %arg1[%c5, %c0_29] : memref<8x128xf32, #tpu.memory_space<vmem>>, vector<1x128xf32>
    %37 = arith.mulf %35, %36 : vector<1x128xf32>
    %cst_30 = arith.constant dense<0.000000e+00> : vector<1x128xf32>
    %38 = tpu.matmul %37, %4, %cst_30 {dimension_numbers = #tpu.dot_dimension_numbers<[1], [0], [0], [1], [0, 0, 1, 1], [], []>} : vector<1x128xf32>, vector<128x128xf32>, vector<1x128xf32> -> vector<1x128xf32>
    %c5_31 = arith.constant 5 : index
    %c0_32 = arith.constant 0 : index
    %39 = vector.load %arg5[%c5_31, %c0_32] : memref<8x128xf32, #tpu.memory_space<vmem>>, vector<1x128xf32>
    %40 = arith.addf %38, %39 : vector<1x128xf32>
    %41 = math.tanh %40 : vector<1x128xf32>
    %c6 = arith.constant 6 : index
    %c0_33 = arith.constant 0 : index
    %42 = vector.load %arg1[%c6, %c0_33] : memref<8x128xf32, #tpu.memory_space<vmem>>, vector<1x128xf32>
    %43 = arith.mulf %41, %42 : vector<1x128xf32>
    %cst_34 = arith.constant dense<0.000000e+00> : vector<1x128xf32>
    %44 = tpu.matmul %43, %4, %cst_34 {dimension_numbers = #tpu.dot_dimension_numbers<[1], [0], [0], [1], [0, 0, 1, 1], [], []>} : vector<1x128xf32>, vector<128x128xf32>, vector<1x128xf32> -> vector<1x128xf32>
    %c6_35 = arith.constant 6 : index
    %c0_36 = arith.constant 0 : index
    %45 = vector.load %arg5[%c6_35, %c0_36] : memref<8x128xf32, #tpu.memory_space<vmem>>, vector<1x128xf32>
    %46 = arith.addf %44, %45 : vector<1x128xf32>
    %47 = math.tanh %46 : vector<1x128xf32>
    %c7 = arith.constant 7 : index
    %c0_37 = arith.constant 0 : index
    %48 = vector.load %arg1[%c7, %c0_37] : memref<8x128xf32, #tpu.memory_space<vmem>>, vector<1x128xf32>
    %49 = arith.mulf %47, %48 : vector<1x128xf32>
    %cst_38 = arith.constant dense<0.000000e+00> : vector<1x128xf32>
    %50 = tpu.matmul %49, %4, %cst_38 {dimension_numbers = #tpu.dot_dimension_numbers<[1], [0], [0], [1], [0, 0, 1, 1], [], []>} : vector<1x128xf32>, vector<128x128xf32>, vector<1x128xf32> -> vector<1x128xf32>
    %c7_39 = arith.constant 7 : index
    %c0_40 = arith.constant 0 : index
    %51 = vector.load %arg5[%c7_39, %c0_40] : memref<8x128xf32, #tpu.memory_space<vmem>>, vector<1x128xf32>
    %52 = arith.addf %50, %51 : vector<1x128xf32>
    %53 = math.tanh %52 : vector<1x128xf32>
    %c0_41 = arith.constant 0 : index
    %c0_42 = arith.constant 0 : index
    %54 = vector.load %arg4[%c0_41, %c0_42] : memref<1x128xf32, #tpu.memory_space<vmem>>, vector<1x128xf32>
    tpu.vector_store %arg4[%c0_41, %c0_42], %53 {strides = array<i32>} : memref<1x128xf32, #tpu.memory_space<vmem>>, vector<1x128xf32>,
    return
  }
}

</mosaic_0001>

<llo_original>
// kernel: tpu_custom_call.1
$region0: #{tpu_custom_call.1}
  #allocation0 [shape = 'u32[]', space=smem, size = 0x4, offset = 0x4, fixed_abs, tag = 'smem constant byte address 0x4 - core index']
  #allocation1 [shape = 'u32[144,128]{1,0:T(1,128)}', space=vmem, size = 0x12000, scoped, tag = 'internal scratch']
  #allocation2 [shape = 'f32[8,128]{1,0:T(8,128)}', space=vmem, size = 0x1000, scoped, tag = 'scratch operand']
  %s0 = inlined_call_operand.hbm [shape: f32[8,8], index: 0, kind: input, shape index: {}]
  %s1 = inlined_call_operand.hbm [shape: f32[8,128], index: 1, kind: input, shape index: {}]
  %s2 = inlined_call_operand.hbm [shape: f32[128,128], index: 2, kind: input, shape index: {}]
  %s3 = inlined_call_operand.vmem [shape: f32[8,128], index: 3, kind: input, shape index: {}]
  %s4 = inlined_call_operand.hbm [shape: f32[1,128], index: 4, kind: output, shape index: {}]
  %s5 = sld [smem:[#allocation0]]
  $region38: #{tpu_custom_call.1} parent=0
    _
  %s7 = ssub.s32 1, %s5
  %s8 = scalar_select 0, %s7, %s5
  $region1: #{tpu_custom_call.1} parent=0
    #allocation3 [shape = 'u8[4096]{0}', space=vmem, size = 0x1000, scoped, tag = 'input window, operand 0, single buffered']
    #allocation4 [shape = 's32[1]{0}', space=sflag, size = 0x4, scoped, tag = 'scoped memory for tpu_custom_call.1']
    #allocation5 [shape = 's32[1]{0}', space=sflag, size = 0x4, scoped, tag = 'scoped memory for tpu_custom_call.1']
    #allocation6 [shape = 'u8[4096]{0}', space=vmem, size = 0x1000, scoped, tag = 'input window, operand 1, single buffered']
    #allocation7 [shape = 's32[1]{0}', space=sflag, size = 0x4, scoped, tag = 'scoped memory for tpu_custom_call.1']
    #allocation8 [shape = 'u8[65536]{0}', space=vmem, size = 0x10000, scoped, tag = 'input window, operand 2, single buffered']
    #allocation9 [shape = 'u8[512]{0}', space=vmem, size = 0x400, scoped, tag = 'output window, operand 0, single buffered']
    %9 = vsyncpa [#allocation4], 0
    %10 = vsyncpa [#allocation7], 0
    %11 = vsyncpa [#allocation5], 0
    // Predicated region
    $region2: #{tpu_custom_call.1} parent=1 // pred_check
      _
    $region3: #{tpu_custom_call.1} parent=1 // pred_check_branch
      %13 = sbr.rel (0) target = $region5
    $region4: #{tpu_custom_call.1} parent=1 // pred_region
      %s15 = ssub.s32 128, 128
      %16 = vsyncadd [#allocation4], %s15
      %s18 = sshll.u32 [#allocation3], 4
      %s19 = int_to_ptr.vmem [resolvable:$true] %s18
      %21 = dma.hbm_to_vmem [thread:$0]  %s0, 128, %s19, [#allocation4]
    $region5: #{tpu_custom_call.1} parent=1 // pred_fallthru
      _
    // Predicated region
    $region6: #{tpu_custom_call.1} parent=1 // pred_check
      _
    $region7: #{tpu_custom_call.1} parent=1 // pred_check_branch
      %23 = sbr.rel (0) target = $region9
    $region8: #{tpu_custom_call.1} parent=1 // pred_region
      %s25 = ssub.s32 128, 128
      %26 = vsyncadd [#allocation7], %s25
      %s28 = sshll.u32 [#allocation6], 4
      %s29 = int_to_ptr.vmem [resolvable:$true] %s28
      %31 = dma.hbm_to_vmem [thread:$0]  %s1, 128, %s29, [#allocation7]
    $region9: #{tpu_custom_call.1} parent=1 // pred_fallthru
      _
    // Predicated region
    $region10: #{tpu_custom_call.1} parent=1 // pred_check
      _
    $region11: #{tpu_custom_call.1} parent=1 // pred_check_branch
      %33 = sbr.rel (0) target = $region13
    $region12: #{tpu_custom_call.1} parent=1 // pred_region
      %s35 = ssub.s32 2048, 2048
      %36 = vsyncadd [#allocation7], %s35
      %s37 = sshll.u32 [#allocation8], 4
      %s38 = int_to_ptr.vmem [resolvable:$true] %s37
      %43 = dma.hbm_to_vmem [thread:$0]  %s2, 2048, %s38, [#allocation7], 128, 128, 8
    $region13: #{tpu_custom_call.1} parent=1 // pred_fallthru
      _
    // Predicated region
    $region14: #{tpu_custom_call.1} parent=1 // pred_check
      _
    $region15: #{tpu_custom_call.1} parent=1 // pred_check_branch
      %45 = sbr.rel (0) target = $region17
    $region16: #{tpu_custom_call.1} parent=1 // pred_region
      _
    $region17: #{tpu_custom_call.1} parent=1 // pred_fallthru
      _
    // Predicated region
    $region18: #{tpu_custom_call.1} parent=1 // pred_check
      _
    $region19: #{tpu_custom_call.1} parent=1 // pred_check_branch
      %47 = sbr.rel (0) target = $region21
    $region20: #{tpu_custom_call.1} parent=1 // pred_region
      %48 = dma.done [#allocation4], 128
    $region21: #{tpu_custom_call.1} parent=1 // pred_fallthru
      _
    // Predicated region
    $region22: #{tpu_custom_call.1} parent=1 // pred_check
      _
    $region23: #{tpu_custom_call.1} parent=1 // pred_check_branch
      %50 = sbr.rel (0) target = $region25
    $region24: #{tpu_custom_call.1} parent=1 // pred_region
      %51 = dma.done [#allocation7], 128
    $region25: #{tpu_custom_call.1} parent=1 // pred_fallthru
      _
    // Predicated region
    $region26: #{tpu_custom_call.1} parent=1 // pred_check
      _
    $region27: #{tpu_custom_call.1} parent=1 // pred_check_branch
      %53 = sbr.rel (0) target = $region29
    $region28: #{tpu_custom_call.1} parent=1 // pred_region
      %54 = dma.done [#allocation7], 2048
    $region29: #{tpu_custom_call.1} parent=1 // pred_fallthru
      _
    %v55 = vld [vmem:[#allocation3] sm:$0xff]
    %v56 = vld [vmem:[%s3] sm:$0xff]
    %vm57 = vcmask 64512
    %v59 = vsel %vm57, %v55, 0
    %61 = vmatprep.subr.mxu0 0.0
    %62 = vmatpush1.msra.mxu0 %v56
    %63 = vmatprep.subr.mxu0 0.0
    %64 = vmatpush1.msra.mxu0 0.0
    %65 = vmatprep.subr.mxu0 0.0
    %66 = vmatpush1.msra.mxu0 0.0
    %67 = vmatprep.subr.mxu0 0.0
    %68 = vmatpush1.msra.mxu0 0.0
    %69 = vmatprep.subr.mxu0 0.0
    %70 = vmatpush1.msra.mxu0 0.0
    %71 = vmatprep.subr.mxu0 0.0
    %72 = vmatpush1.msra.mxu0 0.0
    %73 = vmatprep.subr.mxu0 0.0
    %74 = vmatpush1.msra.mxu0 0.0
    %75 = vmatprep.subr.mxu0 0.0
    %76 = vmatpush1.msra.mxu0 0.0
    %77 = vmatprep.subr.mxu0 0.0
    %78 = vmatpush1.msra.mxu0 0.0
    %79 = vmatprep.subr.mxu0 0.0
    %80 = vmatpush1.msra.mxu0 0.0
    %81 = vmatprep.subr.mxu0 0.0
    %82 = vmatpush1.msra.mxu0 0.0
    %83 = vmatprep.subr.mxu0 0.0
    %84 = vmatpush1.msra.mxu0 0.0
    %85 = vmatprep.subr.mxu0 0.0
    %86 = vmatpush1.msra.mxu0 0.0
    %87 = vmatprep.subr.mxu0 0.0
    %88 = vmatpush1.msra.mxu0 0.0
    %89 = vmatprep.subr.mxu0 0.0
    %90 = vmatpush1.msra.mxu0 0.0
    %91 = vmatprep.subr.mxu0 0.0
    %92 = vmatpush1.msra.mxu0 0.0
    %93 = vmatprep.subr.mxu0 0.0
    %94 = vmatpush1.msra.mxu0 0.0
    %95 = vmatprep.subr.mxu0 0.0
    %96 = vmatpush1.msra.mxu0 0.0
    %97 = vmatprep.subr.mxu0 0.0
    %98 = vmatpush1.msra.mxu0 0.0
    %99 = vmatprep.subr.mxu0 0.0
    %100 = vmatpush1.msra.mxu0 0.0
    %101 = vmatprep.subr.mxu0 0.0
    %102 = vmatpush1.msra.mxu0 0.0
    %103 = vmatprep.subr.mxu0 0.0
    %104 = vmatpush1.msra.mxu0 0.0
    %105 = vmatprep.subr.mxu0 0.0
    %106 = vmatpush1.msra.mxu0 0.0
    %107 = vmatprep.subr.mxu0 0.0
    %108 = vmatpush1.msra.mxu0 0.0
    %109 = vmatprep.subr.mxu0 0.0
    %110 = vmatpush1.msra.mxu0 0.0
    %111 = vmatprep.subr.mxu0 0.0
    %112 = vmatpush1.msra.mxu0 0.0
    %113 = vmatprep.subr.mxu0 0.0
    %114 = vmatpush1.msra.mxu0 0.0
    %115 = vmatprep.subr.mxu0 0.0
    %116 = vmatpush1.msra.mxu0 0.0
    %117 = vmatprep.subr.mxu0 0.0
    %118 = vmatpush1.msra.mxu0 0.0
    %119 = vmatprep.subr.mxu0 0.0
    %120 = vmatpush1.msra.mxu0 0.0
    %121 = vmatprep.subr.mxu0 0.0
    %122 = vmatpush1.msra.mxu0 0.0
    %123 = vmatprep.subr.mxu0 0.0
    %124 = vmatpush1.msra.mxu0 0.0
    %125 = vmatprep.mubr.f32.mxu0 0.0
    %126 = vmatmul.mubr.f32.gmra.mrb[0].mxu0 %v59
    %v127 = vpop.f32.mrb[0].mxu0
    %v128 = vadd.f32 0.0, %v127
    %v129 = vpop.f32.mrb[0].mxu0
    %130 = vdwg.mxu0
    %131 = vst [vmem:[#allocation2] sm:$0xff] %v128
    %v132 = vld [vmem:[#allocation8] sm:$0xff]
    %v133 = vld [vmem:[#allocation8 + $0x8] sm:$0xff]
    %v134 = vld [vmem:[#allocation8 + $0x10] sm:$0xff]
    %v135 = vld [vmem:[#allocation8 + $0x18] sm:$0xff]
    %v136 = vld [vmem:[#allocation8 + $0x20] sm:$0xff]
    %v137 = vld [vmem:[#allocation8 + $0x28] sm:$0xff]
    %v138 = vld [vmem:[#allocation8 + $0x30] sm:$0xff]
    %v139 = vld [vmem:[#allocation8 + $0x38] sm:$0xff]
    %v140 = vld [vmem:[#allocation8 + $0x40] sm:$0xff]
    %v141 = vld [vmem:[#allocation8 + $0x48] sm:$0xff]
    %v142 = vld [vmem:[#allocation8 + $0x50] sm:$0xff]
    %v143 = vld [vmem:[#allocation8 + $0x58] sm:$0xff]
    %v144 = vld [vmem:[#allocation8 + $0x60] sm:$0xff]
    %v145 = vld [vmem:[#allocation8 + $0x68] sm:$0xff]
    %v146 = vld [vmem:[#allocation8 + $0x70] sm:$0xff]
    %v147 = vld [vmem:[#allocation8 + $0x78] sm:$0xff]
    %v148 = vld [vmem:[#allocation6] sm:$0x1]
    %v149 = vmul.f32 %v148, 0.0
    %v150 = vld [vmem:[#allocation2] sm:$0x1]
    %151 = vmatprep.subr.mxu0 0.0
    %152 = vmatpush1.msra.mxu0 %v132
    %153 = vmatprep.subr.mxu0 0.0
    %154 = vmatpush1.msra.mxu0 %v133
    %155 = vmatprep.subr.mxu0 0.0
    %156 = vmatpush1.msra.mxu0 %v134
    %157 = vmatprep.subr.mxu0 0.0
    %158 = vmatpush1.msra.mxu0 %v135
    %159 = vmatprep.subr.mxu0 0.0
    %160 = vmatpush1.msra.mxu0 %v136
    %161 = vmatprep.subr.mxu0 0.0
    %162 = vmatpush1.msra.mxu0 %v137
    %163 = vmatprep.subr.mxu0 0.0
    %164 = vmatpush1.msra.mxu0 %v138
    %165 = vmatprep.subr.mxu0 0.0
    %166 = vmatpush1.msra.mxu0 %v139
    %167 = vmatprep.subr.mxu0 0.0
    %168 = vmatpush1.msra.mxu0 %v140
    %169 = vmatprep.subr.mxu0 0.0
    %170 = vmatpush1.msra.mxu0 %v141
    %171 = vmatprep.subr.mxu0 0.0
    %172 = vmatpush1.msra.mxu0 %v142
    %173 = vmatprep.subr.mxu0 0.0
    %174 = vmatpush1.msra.mxu0 %v143
    %175 = vmatprep.subr.mxu0 0.0
    %176 = vmatpush1.msra.mxu0 %v144
    %177 = vmatprep.subr.mxu0 0.0
    %178 = vmatpush1.msra.mxu0 %v145
    %179 = vmatprep.subr.mxu0 0.0
    %180 = vmatpush1.msra.mxu0 %v146
    %181 = vmatprep.subr.mxu0 0.0
    %182 = vmatpush1.msra.mxu0 %v147
    %183 = vmatprep.subr.mxu0 0.0
    %184 = vmatpush1.msra.mxu0 0.0
    %185 = vmatprep.subr.mxu0 0.0
    %186 = vmatpush1.msra.mxu0 0.0
    %187 = vmatprep.subr.mxu0 0.0
    %188 = vmatpush1.msra.mxu0 0.0
    %189 = vmatprep.subr.mxu0 0.0
    %190 = vmatpush1.msra.mxu0 0.0
    %191 = vmatprep.subr.mxu0 0.0
    %192 = vmatpush1.msra.mxu0 0.0
    %193 = vmatprep.subr.mxu0 0.0
    %194 = vmatpush1.msra.mxu0 0.0
    %195 = vmatprep.subr.mxu0 0.0
    %196 = vmatpush1.msra.mxu0 0.0
    %197 = vmatprep.subr.mxu0 0.0
    %198 = vmatpush1.msra.mxu0 0.0
    %199 = vmatprep.subr.mxu0 0.0
    %200 = vmatpush1.msra.mxu0 0.0
    %201 = vmatprep.subr.mxu0 0.0
    %202 = vmatpush1.msra.mxu0 0.0
    %203 = vmatprep.subr.mxu0 0.0
    %204 = vmatpush1.msra.mxu0 0.0
    %205 = vmatprep.subr.mxu0 0.0
    %206 = vmatpush1.msra.mxu0 0.0
    %207 = vmatprep.subr.mxu0 0.0
    %208 = vmatpush1.msra.mxu0 0.0
    %209 = vmatprep.subr.mxu0 0.0
    %210 = vmatpush1.msra.mxu0 0.0
    %211 = vmatprep.subr.mxu0 0.0
    %212 = vmatpush1.msra.mxu0 0.0
    %213 = vmatprep.subr.mxu0 0.0
    %214 = vmatpush1.msra.mxu0 0.0
    %215 = vmatprep.mubr.f32.mxu0 0.0
    %216 = vmatmul.mubr.f32.gmra.mrb[0].mxu0 %v149
    %v217 = vpop.f32.mrb[0].mxu0
    %v218 = vadd.f32 %v150, %v217
    %v219 = vpop.f32.mrb[0].mxu0
    %220 = vdwg.mxu0
    %v221 = vtanh.pop %v218
    %v222 = vld [vmem:[#allocation6 + $0x1] sm:$0x1]
    %v223 = vmul.f32 %v221, %v222
    %v224 = vld [vmem:[#allocation2 + $0x1] sm:$0x1]
    %225 = vmatprep.subr.mxu0 0.0
    %226 = vmatpush1.msra.mxu0 %v132
    %227 = vmatprep.subr.mxu0 0.0
    %228 = vmatpush1.msra.mxu0 %v133
    %229 = vmatprep.subr.mxu0 0.0
    %230 = vmatpush1.msra.mxu0 %v134
    %231 = vmatprep.subr.mxu0 0.0
    %232 = vmatpush1.msra.mxu0 %v135
    %233 = vmatprep.subr.mxu0 0.0
    %234 = vmatpush1.msra.mxu0 %v136
    %235 = vmatprep.subr.mxu0 0.0
    %236 = vmatpush1.msra.mxu0 %v137
    %237 = vmatprep.subr.mxu0 0.0
    %238 = vmatpush1.msra.mxu0 %v138
    %239 = vmatprep.subr.mxu0 0.0
    %240 = vmatpush1.msra.mxu0 %v139
    %241 = vmatprep.subr.mxu0 0.0
    %242 = vmatpush1.msra.mxu0 %v140
    %243 = vmatprep.subr.mxu0 0.0
    %244 = vmatpush1.msra.mxu0 %v141
    %245 = vmatprep.subr.mxu0 0.0
    %246 = vmatpush1.msra.mxu0 %v142
    %247 = vmatprep.subr.mxu0 0.0
    %248 = vmatpush1.msra.mxu0 %v143
    %249 = vmatprep.subr.mxu0 0.0
    %250 = vmatpush1.msra.mxu0 %v144
    %251 = vmatprep.subr.mxu0 0.0
    %252 = vmatpush1.msra.mxu0 %v145
    %253 = vmatprep.subr.mxu0 0.0
    %254 = vmatpush1.msra.mxu0 %v146
    %255 = vmatprep.subr.mxu0 0.0
    %256 = vmatpush1.msra.mxu0 %v147
    %257 = vmatprep.subr.mxu0 0.0
    %258 = vmatpush1.msra.mxu0 0.0
    %259 = vmatprep.subr.mxu0 0.0
    %260 = vmatpush1.msra.mxu0 0.0
    %261 = vmatprep.subr.mxu0 0.0
    %262 = vmatpush1.msra.mxu0 0.0
    %263 = vmatprep.subr.mxu0 0.0
    %264 = vmatpush1.msra.mxu0 0.0
    %265 = vmatprep.subr.mxu0 0.0
    %266 = vmatpush1.msra.mxu0 0.0
    %267 = vmatprep.subr.mxu0 0.0
    %268 = vmatpush1.msra.mxu0 0.0
    %269 = vmatprep.subr.mxu0 0.0
    %270 = vmatpush1.msra.mxu0 0.0
    %271 = vmatprep.subr.mxu0 0.0
    %272 = vmatpush1.msra.mxu0 0.0
    %273 = vmatprep.subr.mxu0 0.0
    %274 = vmatpush1.msra.mxu0 0.0
    %275 = vmatprep.subr.mxu0 0.0
    %276 = vmatpush1.msra.mxu0 0.0
    %277 = vmatprep.subr.mxu0 0.0
    %278 = vmatpush1.msra.mxu0 0.0
    %279 = vmatprep.subr.mxu0 0.0
    %280 = vmatpush1.msra.mxu0 0.0
    %281 = vmatprep.subr.mxu0 0.0
    %282 = vmatpush1.msra.mxu0 0.0
    %283 = vmatprep.subr.mxu0 0.0
    %284 = vmatpush1.msra.mxu0 0.0
    %285 = vmatprep.subr.mxu0 0.0
    %286 = vmatpush1.msra.mxu0 0.0
    %287 = vmatprep.subr.mxu0 0.0
    %288 = vmatpush1.msra.mxu0 0.0
    %289 = vmatprep.mubr.f32.mxu0 0.0
    %290 = vmatmul.mubr.f32.gmra.mrb[0].mxu0 %v223
    %v291 = vpop.f32.mrb[0].mxu0
    %v292 = vadd.f32 %v224, %v291
    %v293 = vpop.f32.mrb[0].mxu0
    %294 = vdwg.mxu0
    %v295 = vtanh.pop %v292
    %v296 = vld [vmem:[#allocation6 + $0x2] sm:$0x1]
    %v297 = vmul.f32 %v295, %v296
    %v298 = vld [vmem:[#allocation2 + $0x2] sm:$0x1]
    %299 = vmatprep.subr.mxu0 0.0
    %300 = vmatpush1.msra.mxu0 %v132
    %301 = vmatprep.subr.mxu0 0.0
    %302 = vmatpush1.msra.mxu0 %v133
    %303 = vmatprep.subr.mxu0 0.0
    %304 = vmatpush1.msra.mxu0 %v134
    %305 = vmatprep.subr.mxu0 0.0
    %306 = vmatpush1.msra.mxu0 %v135
    %307 = vmatprep.subr.mxu0 0.0
    %308 = vmatpush1.msra.mxu0 %v136
    %309 = vmatprep.subr.mxu0 0.0
    %310 = vmatpush1.msra.mxu0 %v137
    %311 = vmatprep.subr.mxu0 0.0
    %312 = vmatpush1.msra.mxu0 %v138
    %313 = vmatprep.subr.mxu0 0.0
    %314 = vmatpush1.msra.mxu0 %v139
    %315 = vmatprep.subr.mxu0 0.0
    %316 = vmatpush1.msra.mxu0 %v140
    %317 = vmatprep.subr.mxu0 0.0
    %318 = vmatpush1.msra.mxu0 %v141
    %319 = vmatprep.subr.mxu0 0.0
    %320 = vmatpush1.msra.mxu0 %v142
    %321 = vmatprep.subr.mxu0 0.0
    %322 = vmatpush1.msra.mxu0 %v143
    %323 = vmatprep.subr.mxu0 0.0
    %324 = vmatpush1.msra.mxu0 %v144
    %325 = vmatprep.subr.mxu0 0.0
    %326 = vmatpush1.msra.mxu0 %v145
    %327 = vmatprep.subr.mxu0 0.0
    %328 = vmatpush1.msra.mxu0 %v146
    %329 = vmatprep.subr.mxu0 0.0
    %330 = vmatpush1.msra.mxu0 %v147
    %331 = vmatprep.subr.mxu0 0.0
    %332 = vmatpush1.msra.mxu0 0.0
    %333 = vmatprep.subr.mxu0 0.0
    %334 = vmatpush1.msra.mxu0 0.0
    %335 = vmatprep.subr.mxu0 0.0
    %336 = vmatpush1.msra.mxu0 0.0
    %337 = vmatprep.subr.mxu0 0.0
    %338 = vmatpush1.msra.mxu0 0.0
    %339 = vmatprep.subr.mxu0 0.0
    %340 = vmatpush1.msra.mxu0 0.0
    %341 = vmatprep.subr.mxu0 0.0
    %342 = vmatpush1.msra.mxu0 0.0
    %343 = vmatprep.subr.mxu0 0.0
    %344 = vmatpush1.msra.mxu0 0.0
    %345 = vmatprep.subr.mxu0 0.0
    %346 = vmatpush1.msra.mxu0 0.0
    %347 = vmatprep.subr.mxu0 0.0
    %348 = vmatpush1.msra.mxu0 0.0
    %349 = vmatprep.subr.mxu0 0.0
    %350 = vmatpush1.msra.mxu0 0.0
    %351 = vmatprep.subr.mxu0 0.0
    %352 = vmatpush1.msra.mxu0 0.0
    %353 = vmatprep.subr.mxu0 0.0
    %354 = vmatpush1.msra.mxu0 0.0
    %355 = vmatprep.subr.mxu0 0.0
    %356 = vmatpush1.msra.mxu0 0.0
    %357 = vmatprep.subr.mxu0 0.0
    %358 = vmatpush1.msra.mxu0 0.0
    %359 = vmatprep.subr.mxu0 0.0
    %360 = vmatpush1.msra.mxu0 0.0
    %361 = vmatprep.subr.mxu0 0.0
    %362 = vmatpush1.msra.mxu0 0.0
    %363 = vmatprep.mubr.f32.mxu0 0.0
    %364 = vmatmul.mubr.f32.gmra.mrb[0].mxu0 %v297
    %v365 = vpop.f32.mrb[0].mxu0
    %v366 = vadd.f32 %v298, %v365
    %v367 = vpop.f32.mrb[0].mxu0
    %368 = vdwg.mxu0
    %v369 = vtanh.pop %v366
    %v370 = vld [vmem:[#allocation6 + $0x3] sm:$0x1]
    %v371 = vmul.f32 %v369, %v370
    %v372 = vld [vmem:[#allocation2 + $0x3] sm:$0x1]
    %373 = vmatprep.subr.mxu0 0.0
    %374 = vmatpush1.msra.mxu0 %v132
    %375 = vmatprep.subr.mxu0 0.0
    %376 = vmatpush1.msra.mxu0 %v133
    %377 = vmatprep.subr.mxu0 0.0
    %378 = vmatpush1.msra.mxu0 %v134
    %379 = vmatprep.subr.mxu0 0.0
    %380 = vmatpush1.msra.mxu0 %v135
    %381 = vmatprep.subr.mxu0 0.0
    %382 = vmatpush1.msra.mxu0 %v136
    %383 = vmatprep.subr.mxu0 0.0
    %384 = vmatpush1.msra.mxu0 %v137
    %385 = vmatprep.subr.mxu0 0.0
    %386 = vmatpush1.msra.mxu0 %v138
    %387 = vmatprep.subr.mxu0 0.0
    %388 = vmatpush1.msra.mxu0 %v139
    %389 = vmatprep.subr.mxu0 0.0
    %390 = vmatpush1.msra.mxu0 %v140
    %391 = vmatprep.subr.mxu0 0.0
    %392 = vmatpush1.msra.mxu0 %v141
    %393 = vmatprep.subr.mxu0 0.0
    %394 = vmatpush1.msra.mxu0 %v142
    %395 = vmatprep.subr.mxu0 0.0
    %396 = vmatpush1.msra.mxu0 %v143
    %397 = vmatprep.subr.mxu0 0.0
    %398 = vmatpush1.msra.mxu0 %v144
    %399 = vmatprep.subr.mxu0 0.0
    %400 = vmatpush1.msra.mxu0 %v145
    %401 = vmatprep.subr.mxu0 0.0
    %402 = vmatpush1.msra.mxu0 %v146
    %403 = vmatprep.subr.mxu0 0.0
    %404 = vmatpush1.msra.mxu0 %v147
    %405 = vmatprep.subr.mxu0 0.0
    %406 = vmatpush1.msra.mxu0 0.0
    %407 = vmatprep.subr.mxu0 0.0
    %408 = vmatpush1.msra.mxu0 0.0
    %409 = vmatprep.subr.mxu0 0.0
    %410 = vmatpush1.msra.mxu0 0.0
    %411 = vmatprep.subr.mxu0 0.0
    %412 = vmatpush1.msra.mxu0 0.0
    %413 = vmatprep.subr.mxu0 0.0
    %414 = vmatpush1.msra.mxu0 0.0
    %415 = vmatprep.subr.mxu0 0.0
    %416 = vmatpush1.msra.mxu0 0.0
    %417 = vmatprep.subr.mxu0 0.0
    %418 = vmatpush1.msra.mxu0 0.0
    %419 = vmatprep.subr.mxu0 0.0
    %420 = vmatpush1.msra.mxu0 0.0
    %421 = vmatprep.subr.mxu0 0.0
    %422 = vmatpush1.msra.mxu0 0.0
    %423 = vmatprep.subr.mxu0 0.0
    %424 = vmatpush1.msra.mxu0 0.0
    %425 = vmatprep.subr.mxu0 0.0
    %426 = vmatpush1.msra.mxu0 0.0
    %427 = vmatprep.subr.mxu0 0.0
    %428 = vmatpush1.msra.mxu0 0.0
    %429 = vmatprep.subr.mxu0 0.0
    %430 = vmatpush1.msra.mxu0 0.0
    %431 = vmatprep.subr.mxu0 0.0
    %432 = vmatpush1.msra.mxu0 0.0
    %433 = vmatprep.subr.mxu0 0.0
    %434 = vmatpush1.msra.mxu0 0.0
    %435 = vmatprep.subr.mxu0 0.0
    %436 = vmatpush1.msra.mxu0 0.0
    %437 = vmatprep.mubr.f32.mxu0 0.0
    %438 = vmatmul.mubr.f32.gmra.mrb[0].mxu0 %v371
    %v439 = vpop.f32.mrb[0].mxu0
    %v440 = vadd.f32 %v372, %v439
    %v441 = vpop.f32.mrb[0].mxu0
    %442 = vdwg.mxu0
    %v443 = vtanh.pop %v440
    %v444 = vld [vmem:[#allocation6 + $0x4] sm:$0x1]
    %v445 = vmul.f32 %v443, %v444
    %v446 = vld [vmem:[#allocation2 + $0x4] sm:$0x1]
    %447 = vmatprep.subr.mxu0 0.0
    %448 = vmatpush1.msra.mxu0 %v132
    %449 = vmatprep.subr.mxu0 0.0
    %450 = vmatpush1.msra.mxu0 %v133
    %451 = vmatprep.subr.mxu0 0.0
    %452 = vmatpush1.msra.mxu0 %v134
    %453 = vmatprep.subr.mxu0 0.0
    %454 = vmatpush1.msra.mxu0 %v135
    %455 = vmatprep.subr.mxu0 0.0
    %456 = vmatpush1.msra.mxu0 %v136
    %457 = vmatprep.subr.mxu0 0.0
    %458 = vmatpush1.msra.mxu0 %v137
    %459 = vmatprep.subr.mxu0 0.0
    %460 = vmatpush1.msra.mxu0 %v138
    %461 = vmatprep.subr.mxu0 0.0
    %462 = vmatpush1.msra.mxu0 %v139
    %463 = vmatprep.subr.mxu0 0.0
    %464 = vmatpush1.msra.mxu0 %v140
    %465 = vmatprep.subr.mxu0 0.0
    %466 = vmatpush1.msra.mxu0 %v141
    %467 = vmatprep.subr.mxu0 0.0
    %468 = vmatpush1.msra.mxu0 %v142
    %469 = vmatprep.subr.mxu0 0.0
    %470 = vmatpush1.msra.mxu0 %v143
    %471 = vmatprep.subr.mxu0 0.0
    %472 = vmatpush1.msra.mxu0 %v144
    %473 = vmatprep.subr.mxu0 0.0
    %474 = vmatpush1.msra.mxu0 %v145
    %475 = vmatprep.subr.mxu0 0.0
    %476 = vmatpush1.msra.mxu0 %v146
    %477 = vmatprep.subr.mxu0 0.0
    %478 = vmatpush1.msra.mxu0 %v147
    %479 = vmatprep.subr.mxu0 0.0
    %480 = vmatpush1.msra.mxu0 0.0
    %481 = vmatprep.subr.mxu0 0.0
    %482 = vmatpush1.msra.mxu0 0.0
    %483 = vmatprep.subr.mxu0 0.0
    %484 = vmatpush1.msra.mxu0 0.0
    %485 = vmatprep.subr.mxu0 0.0
    %486 = vmatpush1.msra.mxu0 0.0
    %487 = vmatprep.subr.mxu0 0.0
    %488 = vmatpush1.msra.mxu0 0.0
    %489 = vmatprep.subr.mxu0 0.0
    %490 = vmatpush1.msra.mxu0 0.0
    %491 = vmatprep.subr.mxu0 0.0
    %492 = vmatpush1.msra.mxu0 0.0
    %493 = vmatprep.subr.mxu0 0.0
    %494 = vmatpush1.msra.mxu0 0.0
    %495 = vmatprep.subr.mxu0 0.0
    %496 = vmatpush1.msra.mxu0 0.0
    %497 = vmatprep.subr.mxu0 0.0
    %498 = vmatpush1.msra.mxu0 0.0
    %499 = vmatprep.subr.mxu0 0.0
    %500 = vmatpush1.msra.mxu0 0.0
    %501 = vmatprep.subr.mxu0 0.0
    %502 = vmatpush1.msra.mxu0 0.0
    %503 = vmatprep.subr.mxu0 0.0
    %504 = vmatpush1.msra.mxu0 0.0
    %505 = vmatprep.subr.mxu0 0.0
    %506 = vmatpush1.msra.mxu0 0.0
    %507 = vmatprep.subr.mxu0 0.0
    %508 = vmatpush1.msra.mxu0 0.0
    %509 = vmatprep.subr.mxu0 0.0
    %510 = vmatpush1.msra.mxu0 0.0
    %511 = vmatprep.mubr.f32.mxu0 0.0
    %512 = vmatmul.mubr.f32.gmra.mrb[0].mxu0 %v445
    %v513 = vpop.f32.mrb[0].mxu0
    %v514 = vadd.f32 %v446, %v513
    %v515 = vpop.f32.mrb[0].mxu0
    %516 = vdwg.mxu0
    %v517 = vtanh.pop %v514
    %v518 = vld [vmem:[#allocation6 + $0x5] sm:$0x1]
    %v519 = vmul.f32 %v517, %v518
    %v520 = vld [vmem:[#allocation2 + $0x5] sm:$0x1]
    %521 = vmatprep.subr.mxu0 0.0
    %522 = vmatpush1.msra.mxu0 %v132
    %523 = vmatprep.subr.mxu0 0.0
    %524 = vmatpush1.msra.mxu0 %v133
    %525 = vmatprep.subr.mxu0 0.0
    %526 = vmatpush1.msra.mxu0 %v134
    %527 = vmatprep.subr.mxu0 0.0
    %528 = vmatpush1.msra.mxu0 %v135
    %529 = vmatprep.subr.mxu0 0.0
    %530 = vmatpush1.msra.mxu0 %v136
    %531 = vmatprep.subr.mxu0 0.0
    %532 = vmatpush1.msra.mxu0 %v137
    %533 = vmatprep.subr.mxu0 0.0
    %534 = vmatpush1.msra.mxu0 %v138
    %535 = vmatprep.subr.mxu0 0.0
    %536 = vmatpush1.msra.mxu0 %v139
    %537 = vmatprep.subr.mxu0 0.0
    %538 = vmatpush1.msra.mxu0 %v140
    %539 = vmatprep.subr.mxu0 0.0
    %540 = vmatpush1.msra.mxu0 %v141
    %541 = vmatprep.subr.mxu0 0.0
    %542 = vmatpush1.msra.mxu0 %v142
    %543 = vmatprep.subr.mxu0 0.0
    %544 = vmatpush1.msra.mxu0 %v143
    %545 = vmatprep.subr.mxu0 0.0
    %546 = vmatpush1.msra.mxu0 %v144
    %547 = vmatprep.subr.mxu0 0.0
    %548 = vmatpush1.msra.mxu0 %v145
    %549 = vmatprep.subr.mxu0 0.0
    %550 = vmatpush1.msra.mxu0 %v146
    %551 = vmatprep.subr.mxu0 0.0
    %552 = vmatpush1.msra.mxu0 %v147
    %553 = vmatprep.subr.mxu0 0.0
    %554 = vmatpush1.msra.mxu0 0.0
    %555 = vmatprep.subr.mxu0 0.0
    %556 = vmatpush1.msra.mxu0 0.0
    %557 = vmatprep.subr.mxu0 0.0
    %558 = vmatpush1.msra.mxu0 0.0
    %559 = vmatprep.subr.mxu0 0.0
    %560 = vmatpush1.msra.mxu0 0.0
    %561 = vmatprep.subr.mxu0 0.0
    %562 = vmatpush1.msra.mxu0 0.0
    %563 = vmatprep.subr.mxu0 0.0
    %564 = vmatpush1.msra.mxu0 0.0
    %565 = vmatprep.subr.mxu0 0.0
    %566 = vmatpush1.msra.mxu0 0.0
    %567 = vmatprep.subr.mxu0 0.0
    %568 = vmatpush1.msra.mxu0 0.0
    %569 = vmatprep.subr.mxu0 0.0
    %570 = vmatpush1.msra.mxu0 0.0
    %571 = vmatprep.subr.mxu0 0.0
    %572 = vmatpush1.msra.mxu0 0.0
    %573 = vmatprep.subr.mxu0 0.0
    %574 = vmatpush1.msra.mxu0 0.0
    %575 = vmatprep.subr.mxu0 0.0
    %576 = vmatpush1.msra.mxu0 0.0
    %577 = vmatprep.subr.mxu0 0.0
    %578 = vmatpush1.msra.mxu0 0.0
    %579 = vmatprep.subr.mxu0 0.0
    %580 = vmatpush1.msra.mxu0 0.0
    %581 = vmatprep.subr.mxu0 0.0
    %582 = vmatpush1.msra.mxu0 0.0
    %583 = vmatprep.subr.mxu0 0.0
    %584 = vmatpush1.msra.mxu0 0.0
    %585 = vmatprep.mubr.f32.mxu0 0.0
    %586 = vmatmul.mubr.f32.gmra.mrb[0].mxu0 %v519
    %v587 = vpop.f32.mrb[0].mxu0
    %v588 = vadd.f32 %v520, %v587
    %v589 = vpop.f32.mrb[0].mxu0
    %590 = vdwg.mxu0
    %v591 = vtanh.pop %v588
    %v592 = vld [vmem:[#allocation6 + $0x6] sm:$0x1]
    %v593 = vmul.f32 %v591, %v592
    %v594 = vld [vmem:[#allocation2 + $0x6] sm:$0x1]
    %595 = vmatprep.subr.mxu0 0.0
    %596 = vmatpush1.msra.mxu0 %v132
    %597 = vmatprep.subr.mxu0 0.0
    %598 = vmatpush1.msra.mxu0 %v133
    %599 = vmatprep.subr.mxu0 0.0
    %600 = vmatpush1.msra.mxu0 %v134
    %601 = vmatprep.subr.mxu0 0.0
    %602 = vmatpush1.msra.mxu0 %v135
    %603 = vmatprep.subr.mxu0 0.0
    %604 = vmatpush1.msra.mxu0 %v136
    %605 = vmatprep.subr.mxu0 0.0
    %606 = vmatpush1.msra.mxu0 %v137
    %607 = vmatprep.subr.mxu0 0.0
    %608 = vmatpush1.msra.mxu0 %v138
    %609 = vmatprep.subr.mxu0 0.0
    %610 = vmatpush1.msra.mxu0 %v139
    %611 = vmatprep.subr.mxu0 0.0
    %612 = vmatpush1.msra.mxu0 %v140
    %613 = vmatprep.subr.mxu0 0.0
    %614 = vmatpush1.msra.mxu0 %v141
    %615 = vmatprep.subr.mxu0 0.0
    %616 = vmatpush1.msra.mxu0 %v142
    %617 = vmatprep.subr.mxu0 0.0
    %618 = vmatpush1.msra.mxu0 %v143
    %619 = vmatprep.subr.mxu0 0.0
    %620 = vmatpush1.msra.mxu0 %v144
    %621 = vmatprep.subr.mxu0 0.0
    %622 = vmatpush1.msra.mxu0 %v145
    %623 = vmatprep.subr.mxu0 0.0
    %624 = vmatpush1.msra.mxu0 %v146
    %625 = vmatprep.subr.mxu0 0.0
    %626 = vmatpush1.msra.mxu0 %v147
    %627 = vmatprep.subr.mxu0 0.0
    %628 = vmatpush1.msra.mxu0 0.0
    %629 = vmatprep.subr.mxu0 0.0
    %630 = vmatpush1.msra.mxu0 0.0
    %631 = vmatprep.subr.mxu0 0.0
    %632 = vmatpush1.msra.mxu0 0.0
    %633 = vmatprep.subr.mxu0 0.0
    %634 = vmatpush1.msra.mxu0 0.0
    %635 = vmatprep.subr.mxu0 0.0
    %636 = vmatpush1.msra.mxu0 0.0
    %637 = vmatprep.subr.mxu0 0.0
    %638 = vmatpush1.msra.mxu0 0.0
    %639 = vmatprep.subr.mxu0 0.0
    %640 = vmatpush1.msra.mxu0 0.0
    %641 = vmatprep.subr.mxu0 0.0
    %642 = vmatpush1.msra.mxu0 0.0
    %643 = vmatprep.subr.mxu0 0.0
    %644 = vmatpush1.msra.mxu0 0.0
    %645 = vmatprep.subr.mxu0 0.0
    %646 = vmatpush1.msra.mxu0 0.0
    %647 = vmatprep.subr.mxu0 0.0
    %648 = vmatpush1.msra.mxu0 0.0
    %649 = vmatprep.subr.mxu0 0.0
    %650 = vmatpush1.msra.mxu0 0.0
    %651 = vmatprep.subr.mxu0 0.0
    %652 = vmatpush1.msra.mxu0 0.0
    %653 = vmatprep.subr.mxu0 0.0
    %654 = vmatpush1.msra.mxu0 0.0
    %655 = vmatprep.subr.mxu0 0.0
    %656 = vmatpush1.msra.mxu0 0.0
    %657 = vmatprep.subr.mxu0 0.0
    %658 = vmatpush1.msra.mxu0 0.0
    %659 = vmatprep.mubr.f32.mxu0 0.0
    %660 = vmatmul.mubr.f32.gmra.mrb[0].mxu0 %v593
    %v661 = vpop.f32.mrb[0].mxu0
    %v662 = vadd.f32 %v594, %v661
    %v663 = vpop.f32.mrb[0].mxu0
    %664 = vdwg.mxu0
    %v665 = vtanh.pop %v662
    %v666 = vld [vmem:[#allocation6 + $0x7] sm:$0x1]
    %v667 = vmul.f32 %v665, %v666
    %v668 = vld [vmem:[#allocation2 + $0x7] sm:$0x1]
    %669 = vmatprep.subr.mxu0 0.0
    %670 = vmatpush1.msra.mxu0 %v132
    %671 = vmatprep.subr.mxu0 0.0
    %672 = vmatpush1.msra.mxu0 %v133
    %673 = vmatprep.subr.mxu0 0.0
    %674 = vmatpush1.msra.mxu0 %v134
    %675 = vmatprep.subr.mxu0 0.0
    %676 = vmatpush1.msra.mxu0 %v135
    %677 = vmatprep.subr.mxu0 0.0
    %678 = vmatpush1.msra.mxu0 %v136
    %679 = vmatprep.subr.mxu0 0.0
    %680 = vmatpush1.msra.mxu0 %v137
    %681 = vmatprep.subr.mxu0 0.0
    %682 = vmatpush1.msra.mxu0 %v138
    %683 = vmatprep.subr.mxu0 0.0
    %684 = vmatpush1.msra.mxu0 %v139
    %685 = vmatprep.subr.mxu0 0.0
    %686 = vmatpush1.msra.mxu0 %v140
    %687 = vmatprep.subr.mxu0 0.0
    %688 = vmatpush1.msra.mxu0 %v141
    %689 = vmatprep.subr.mxu0 0.0
    %690 = vmatpush1.msra.mxu0 %v142
    %691 = vmatprep.subr.mxu0 0.0
    %692 = vmatpush1.msra.mxu0 %v143
    %693 = vmatprep.subr.mxu0 0.0
    %694 = vmatpush1.msra.mxu0 %v144
    %695 = vmatprep.subr.mxu0 0.0
    %696 = vmatpush1.msra.mxu0 %v145
    %697 = vmatprep.subr.mxu0 0.0
    %698 = vmatpush1.msra.mxu0 %v146
    %699 = vmatprep.subr.mxu0 0.0
    %700 = vmatpush1.msra.mxu0 %v147
    %701 = vmatprep.subr.mxu0 0.0
    %702 = vmatpush1.msra.mxu0 0.0
    %703 = vmatprep.subr.mxu0 0.0
    %704 = vmatpush1.msra.mxu0 0.0
    %705 = vmatprep.subr.mxu0 0.0
    %706 = vmatpush1.msra.mxu0 0.0
    %707 = vmatprep.subr.mxu0 0.0
    %708 = vmatpush1.msra.mxu0 0.0
    %709 = vmatprep.subr.mxu0 0.0
    %710 = vmatpush1.msra.mxu0 0.0
    %711 = vmatprep.subr.mxu0 0.0
    %712 = vmatpush1.msra.mxu0 0.0
    %713 = vmatprep.subr.mxu0 0.0
    %714 = vmatpush1.msra.mxu0 0.0
    %715 = vmatprep.subr.mxu0 0.0
    %716 = vmatpush1.msra.mxu0 0.0
    %717 = vmatprep.subr.mxu0 0.0
    %718 = vmatpush1.msra.mxu0 0.0
    %719 = vmatprep.subr.mxu0 0.0
    %720 = vmatpush1.msra.mxu0 0.0
    %721 = vmatprep.subr.mxu0 0.0
    %722 = vmatpush1.msra.mxu0 0.0
    %723 = vmatprep.subr.mxu0 0.0
    %724 = vmatpush1.msra.mxu0 0.0
    %725 = vmatprep.subr.mxu0 0.0
    %726 = vmatpush1.msra.mxu0 0.0
    %727 = vmatprep.subr.mxu0 0.0
    %728 = vmatpush1.msra.mxu0 0.0
    %729 = vmatprep.subr.mxu0 0.0
    %730 = vmatpush1.msra.mxu0 0.0
    %731 = vmatprep.subr.mxu0 0.0
    %732 = vmatpush1.msra.mxu0 0.0
    %733 = vmatprep.mubr.f32.mxu0 0.0
    %734 = vmatmul.mubr.f32.gmra.mrb[0].mxu0 %v667
    %v735 = vpop.f32.mrb[0].mxu0
    %v736 = vadd.f32 %v668, %v735
    %v737 = vpop.f32.mrb[0].mxu0
    %738 = vdwg.mxu0
    %v739 = vtanh.pop %v736
    %740 = vst [vmem:[#allocation9] sm:$0x1] %v739
    // Predicated region
    $region30: #{tpu_custom_call.1} parent=1 // pred_check
      _
    $region31: #{tpu_custom_call.1} parent=1 // pred_check_branch
      %742 = sbr.rel (0) target = $region33
    $region32: #{tpu_custom_call.1} parent=1 // pred_region
      %s744 = ssub.s32 16, 16
      %745 = vsyncadd [#allocation5], %s744
      %s747 = sshll.u32 [#allocation9], 4
      %s748 = int_to_ptr.vmem [resolvable:$true] %s747
      %750 = dma.vmem_to_hbm [thread:$0]  %s748, 16, %s4, [#allocation5]
    $region33: #{tpu_custom_call.1} parent=1 // pred_fallthru
      _
    // Predicated region
    $region34: #{tpu_custom_call.1} parent=1 // pred_check
      _
    $region35: #{tpu_custom_call.1} parent=1 // pred_check_branch
      %752 = sbr.rel (0) target = $region37
    $region36: #{tpu_custom_call.1} parent=1 // pred_region
      %753 = dma.done [#allocation5], 16
    $region37: #{tpu_custom_call.1} parent=1 // pred_fallthru
      _
    %754 = vsyncpa [#allocation4], 1
    %755 = vsyncpa [#allocation7], 1
    %756 = vsyncpa [#allocation5], 1

</llo_original>
